<compile_context>
chip_gen: v6e
topology: v6e:2x2x1
jax: 0.10.0
libtpu: 0.0.40
codegen_flags: <defaults>
</compile_context>

<pallas_src>
import jax
import jax.numpy as jnp
from jax.experimental import pallas as pl
from jax.experimental.pallas import tpu as pltpu

STATE_DIM = 3       # Pendulum-v1 observation_space.shape[0]
ACTION_DIM = 1      # Pendulum-v1 action_space.shape[0]
IN_DIM = STATE_DIM + ACTION_DIM
IN_AUG = IN_DIM + 1          # [x | u | 1]; ones column folds the layer-1/4 bias
HIDDEN = 256
OUT_PAD = 128                # lane-dense output width (q1 in col 0, q2 in col 1)


def _round_up(x, m):
    return (x + m - 1) // m * m


def _device_kind():
    try:
        return jax.devices()[0].device_kind.lower()
    except Exception:
        return ""


_KIND = _device_kind()
# bf16 elementwise only where the VPU has a native bf16 path (v6e / v7x).
_EW_DTYPE = (jnp.float32
             if any(v in _KIND for v in ("v2", "v3", "v4", "v5"))
             else jnp.bfloat16)
# v7x has 2 TensorCores per chip: give the "parallel" batch axis >= 2 steps.
_MIN_GRID = 2 if "v7" in _KIND else 1


def _make_kernel(ew_dtype):
    def kernel(xu_ref, w1a_ref, w1b_ref, w2_ref, b2_ref, w5_ref, b5_ref,
               w3p_ref, w6p_ref, b36_ref, q_ref):
        xu = xu_ref[...]                                        # (TB, 5) f32

        def branch(w1_ref, wmid_ref, bmid_ref, whead_ref):
            # layer 1/4: bias folded into the ones column of xu -> pure matmul
            h = jnp.dot(xu, w1_ref[...], preferred_element_type=jnp.float32)
            h = jnp.maximum(h.astype(ew_dtype), 0.0).astype(jnp.bfloat16)
            # layer 2/5: bf16 MXU, f32 accumulation, elementwise in ew_dtype
            h = jnp.dot(h, wmid_ref[...], preferred_element_type=jnp.float32)
            h = h.astype(ew_dtype) + bmid_ref[...].astype(ew_dtype)
            h = jnp.maximum(h, 0.0).astype(jnp.bfloat16)
            # layer 3/6: head zero-padded to 128 output lanes
            return jnp.dot(h, whead_ref[...], preferred_element_type=jnp.float32)

        q = branch(w1a_ref, w2_ref, b2_ref, w3p_ref)            # Q1 -> lane 0
        q = q + branch(w1b_ref, w5_ref, b5_ref, w6p_ref)        # Q2 -> lane 1
        q_ref[...] = (q + b36_ref[...]).astype(q_ref.dtype)

    return kernel


def pack_params(p):
    """Repack per-layer (in,out) f32 params into the fused / bf16 kernel layout."""
    def head_pad(w, col):
        out = jnp.zeros((HIDDEN, OUT_PAD), jnp.float32)
        return out.at[:, col:col + 1].set(w)

    b36 = jnp.zeros((1, OUT_PAD), jnp.float32)
    b36 = b36.at[0, 0].set(p["b3"][0, 0]).at[0, 1].set(p["b6"][0, 0])
    return dict(
        # layer-1/4 weights with the bias appended as an extra input row,
        # matching the ones column the wrapper appends to [x|u]
        w1a=jnp.concatenate([p["w1"], p["b1"]], axis=0),        # (5, 256) f32
        w1b=jnp.concatenate([p["w4"], p["b4"]], axis=0),        # (5, 256) f32
        w2=p["w2"].astype(jnp.bfloat16), b2=p["b2"],
        w5=p["w5"].astype(jnp.bfloat16), b5=p["b5"],
        w3p=head_pad(p["w3"], 0).astype(jnp.bfloat16),          # (256, 128) bf16
        w6p=head_pad(p["w6"], 1).astype(jnp.bfloat16),          # (256, 128) bf16
        b36=b36,                                                # (1, 128) f32
    )


def critic_forward(x, u, packed, *, block_b=1024, min_grid=None):
    """Pallas forward pass of Critic. Returns (q1, q2), each (B, 1) float32."""
    assert block_b >= 8
    B = x.shape[0]
    if min_grid is None:
        min_grid = _MIN_GRID if B >= 16 else 1

    # Smallest grid whose 8-aligned tile fits block_b -> minimal padding waste.
    grid_len = max(int(min_grid), 1)
    while _round_up(-(-B // grid_len), 8) > block_b:
        grid_len += 1
    TB = _round_up(-(-B // grid_len), 8)
    Bp = grid_len * TB

    # [x | u | 1]; the ones column applies the layer-1/4 bias inside the matmul.
    xu = jnp.concatenate(
        [x.astype(jnp.float32), u.astype(jnp.float32),
         jnp.ones((B, 1), jnp.float32)], axis=1)                # (B, 5)
    if Bp != B:
        xu = jnp.pad(xu, ((0, Bp - B), (0, 0)))

    def resident(shape):
        # Full-array block with a constant index_map -> stays VMEM-resident.
        return pl.BlockSpec(shape, lambda i: (0, 0))

    flops = 2 * 2 * Bp * (IN_AUG * HIDDEN + HIDDEN * HIDDEN + HIDDEN * OUT_PAD)
    bytes_accessed = (
        xu.size * 4 + Bp * OUT_PAD * 4
        + packed["w1a"].size * 4 + packed["w1b"].size * 4
        + packed["w2"].size * 2 + packed["w5"].size * 2
        + packed["b2"].size * 4 + packed["b5"].size * 4
        + packed["w3p"].size * 2 + packed["w6p"].size * 2
        + packed["b36"].size * 4)

    q = pl.pallas_call(
        _make_kernel(_EW_DTYPE),
        out_shape=jax.ShapeDtypeStruct((Bp, OUT_PAD), jnp.float32),
        grid=(grid_len,),
        in_specs=[
            pl.BlockSpec((TB, IN_AUG), lambda i: (i, 0)),       # xu tile
            resident((IN_AUG, HIDDEN)),                         # w1a (f32)
            resident((IN_AUG, HIDDEN)),                         # w1b (f32)
            resident((HIDDEN, HIDDEN)),                         # w2  (bf16)
            resident((1, HIDDEN)),                              # b2  (f32)
            resident((HIDDEN, HIDDEN)),                         # w5  (bf16)
            resident((1, HIDDEN)),                              # b5  (f32)
            resident((HIDDEN, OUT_PAD)),                        # w3p (bf16)
            resident((HIDDEN, OUT_PAD)),                        # w6p (bf16)
            resident((1, OUT_PAD)),                             # b36 (f32)
        ],
        out_specs=pl.BlockSpec((TB, OUT_PAD), lambda i: (i, 0)),
        compiler_params=pltpu.CompilerParams(
            dimension_semantics=("parallel",)),
        cost_estimate=pl.CostEstimate(
            flops=flops, transcendentals=0, bytes_accessed=bytes_accessed),
    )(xu,
      packed["w1a"], packed["w1b"],
      packed["w2"], packed["b2"], packed["w5"], packed["b5"],
      packed["w3p"], packed["w6p"], packed["b36"])

    return q[:B, 0:1], q[:B, 1:2]


def init_params(key, state_dim=STATE_DIM, action_dim=ACTION_DIM, hidden=HIDDEN):
    """PyTorch-Linear-style init; weights stored as (in_features, out_features)."""
    in_dim = state_dim + action_dim

    def linear(k, fan_in, fan_out):
        kw, kb = jax.random.split(k)
        bound = 1.0 / jnp.sqrt(fan_in)
        w = jax.random.uniform(kw, (fan_in, fan_out), jnp.float32, -bound, bound)
        b = jax.random.uniform(kb, (1, fan_out), jnp.float32, -bound, bound)
        return w, b

    keys = jax.random.split(key, 6)
    w1, b1 = linear(keys[0], in_dim, hidden)
    w2, b2 = linear(keys[1], hidden, hidden)
    w3, b3 = linear(keys[2], hidden, 1)
    w4, b4 = linear(keys[3], in_dim, hidden)
    w5, b5 = linear(keys[4], hidden, hidden)
    w6, b6 = linear(keys[5], hidden, 1)
    return dict(w1=w1, b1=b1, w2=w2, b2=b2, w3=w3, b3=b3,
                w4=w4, b4=b4, w5=w5, b5=b5, w6=w6, b6=b6)


def _reference_forward(x, u, p):
    xu = jnp.concatenate([x, u], axis=1)
    h = jnp.maximum(xu @ p["w1"] + p["b1"], 0.0)
    h = jnp.maximum(h @ p["w2"] + p["b2"], 0.0)
    q1 = h @ p["w3"] + p["b3"]
    g = jnp.maximum(xu @ p["w4"] + p["b4"], 0.0)
    g = jnp.maximum(g @ p["w5"] + p["b5"], 0.0)
    q2 = g @ p["w6"] + p["b6"]
    return q1, q2


if __name__ == "__main__":
    key = jax.random.PRNGKey(0)
    kp, kx, ku = jax.random.split(key, 3)

    params = init_params(kp)
    packed = pack_params(params)
    fwd = jax.jit(critic_forward, static_argnames=("block_b", "min_grid"))

    # small batch (single grid step; two steps on v7x would need B >= 16)
    batch = 8
    x = jax.random.normal(kx, (batch, STATE_DIM), jnp.float32)
    u = jax.random.normal(ku, (batch, ACTION_DIM), jnp.float32)
    q1, q2 = fwd(x, u, packed)
    jax.block_until_ready((q1, q2))
    r1, r2 = _reference_forward(x, u, params)
    assert q1.shape == (batch, 1) and q2.shape == (batch, 1)
    assert jnp.allclose(q1, r1, atol=2e-2, rtol=2e-2)   # bf16 weight tolerance
    assert jnp.allclose(q2, r2, atol=2e-2, rtol=2e-2)

    # awkward batch exercising the multi-step grid + minimal-padding path
    batch2 = 300
    kx2, ku2 = jax.random.split(jax.random.PRNGKey(1))
    x2 = jax.random.normal(kx2, (batch2, STATE_DIM), jnp.float32)
    u2 = jax.random.normal(ku2, (batch2, ACTION_DIM), jnp.float32)
    q1b, q2b = fwd(x2, u2, packed, block_b=128)   # force a multi-tile grid
    jax.block_until_ready((q1b, q2b))
    r1b, r2b = _reference_forward(x2, u2, params)
    assert q1b.shape == (batch2, 1) and q2b.shape == (batch2, 1)
    assert jnp.allclose(q1b, r1b, atol=2e-2, rtol=2e-2)
    assert jnp.allclose(q2b, r2b, atol=2e-2, rtol=2e-2)

    print("KERNEL_OK")
</pallas_src>

<mosaic_0001>
module attributes {stable_mosaic.version = 11 : i64} {
  func.func @kernel(%arg0: i32, %arg1: memref<8x5xf32, #tpu.memory_space<vmem>>, %arg2: memref<5x256xf32, #tpu.memory_space<vmem>>, %arg3: memref<5x256xf32, #tpu.memory_space<vmem>>, %arg4: memref<256x256xbf16, #tpu.memory_space<vmem>>, %arg5: memref<1x256xf32, #tpu.memory_space<vmem>>, %arg6: memref<256x256xbf16, #tpu.memory_space<vmem>>, %arg7: memref<1x256xf32, #tpu.memory_space<vmem>>, %arg8: memref<256x128xbf16, #tpu.memory_space<vmem>>, %arg9: memref<256x128xbf16, #tpu.memory_space<vmem>>, %arg10: memref<1x128xf32, #tpu.memory_space<vmem>>, %arg11: memref<8x128xf32, #tpu.memory_space<vmem>>) attributes {dimension_semantics = [#tpu.dimension_semantics<parallel>], iteration_bounds = array<i64: 1>, scalar_prefetch = 0 : i64, scratch_operands = 0 : i64, tpu.core_type = #tpu.core_type<tc>, window_params = [{transform_indices = @transform_0, window_bounds = array<i64: 8, 5>}, {pipeline_mode = #tpu.pipeline_mode<synchronous>, transform_indices = @transform_1, window_bounds = array<i64: 5, 256>}, {pipeline_mode = #tpu.pipeline_mode<synchronous>, transform_indices = @transform_2, window_bounds = array<i64: 5, 256>}, {pipeline_mode = #tpu.pipeline_mode<synchronous>, transform_indices = @transform_3, window_bounds = array<i64: 256, 256>}, {pipeline_mode = #tpu.pipeline_mode<synchronous>, transform_indices = @transform_4, window_bounds = array<i64: 1, 256>}, {pipeline_mode = #tpu.pipeline_mode<synchronous>, transform_indices = @transform_5, window_bounds = array<i64: 256, 256>}, {pipeline_mode = #tpu.pipeline_mode<synchronous>, transform_indices = @transform_6, window_bounds = array<i64: 1, 256>}, {pipeline_mode = #tpu.pipeline_mode<synchronous>, transform_indices = @transform_7, window_bounds = array<i64: 256, 128>}, {pipeline_mode = #tpu.pipeline_mode<synchronous>, transform_indices = @transform_8, window_bounds = array<i64: 256, 128>}, {pipeline_mode = #tpu.pipeline_mode<synchronous>, transform_indices = @transform_9, window_bounds = array<i64: 1, 128>}, {transform_indices = @transform_10, window_bounds = array<i64: 8, 128>}]} {
    %c0 = arith.constant 0 : index
    %c0_0 = arith.constant 0 : index
    %0 = vector.load %arg1[%c0, %c0_0] : memref<8x5xf32, #tpu.memory_space<vmem>>, vector<8x5xf32>
    %c0_1 = arith.constant 0 : index
    %c0_2 = arith.constant 0 : index
    %1 = vector.load %arg2[%c0_1, %c0_2] : memref<5x256xf32, #tpu.memory_space<vmem>>, vector<5x256xf32>
    %cst = arith.constant dense<0.000000e+00> : vector<8x256xf32>
    %2 = tpu.matmul %0, %1, %cst {dimension_numbers = #tpu.dot_dimension_numbers<[1], [0], [0], [1], [0, 0, 1, 1], [], []>} : vector<8x5xf32>, vector<5x256xf32>, vector<8x256xf32> -> vector<8x256xf32>
    %3 = arith.truncf %2 : vector<8x256xf32> to vector<8x256xbf16>
    %cst_3 = arith.constant 0.000000e+00 : bf16
    %4 = vector.broadcast %cst_3 : bf16 to vector<8x256xbf16>
    %5 = arith.maximumf %3, %4 : vector<8x256xbf16>
    %c0_4 = arith.constant 0 : index
    %c0_5 = arith.constant 0 : index
    %6 = vector.load %arg4[%c0_4, %c0_5] : memref<256x256xbf16, #tpu.memory_space<vmem>>, vector<256x256xbf16>
    %cst_6 = arith.constant dense<0.000000e+00> : vector<8x256xf32>
    %7 = tpu.matmul %5, %6, %cst_6 {dimension_numbers = #tpu.dot_dimension_numbers<[1], [0], [0], [1], [0, 0, 1, 1], [], []>} : vector<8x256xbf16>, vector<256x256xbf16>, vector<8x256xf32> -> vector<8x256xf32>
    %8 = arith.truncf %7 : vector<8x256xf32> to vector<8x256xbf16>
    %c0_7 = arith.constant 0 : index
    %c0_8 = arith.constant 0 : index
    %9 = vector.load %arg5[%c0_7, %c0_8] : memref<1x256xf32, #tpu.memory_space<vmem>>, vector<1x256xf32>
    %10 = arith.truncf %9 : vector<1x256xf32> to vector<1x256xbf16>
    %11 = vector.broadcast %10 : vector<1x256xbf16> to vector<8x256xbf16>
    %12 = arith.addf %8, %11 : vector<8x256xbf16>
    %cst_9 = arith.constant 0.000000e+00 : bf16
    %13 = vector.broadcast %cst_9 : bf16 to vector<8x256xbf16>
    %14 = arith.maximumf %12, %13 : vector<8x256xbf16>
    %c0_10 = arith.constant 0 : index
    %c0_11 = arith.constant 0 : index
    %15 = vector.load %arg8[%c0_10, %c0_11] : memref<256x128xbf16, #tpu.memory_space<vmem>>, vector<256x128xbf16>
    %cst_12 = arith.constant dense<0.000000e+00> : vector<8x128xf32>
    %16 = tpu.matmul %14, %15, %cst_12 {dimension_numbers = #tpu.dot_dimension_numbers<[1], [0], [0], [1], [0, 0, 1, 1], [], []>} : vector<8x256xbf16>, vector<256x128xbf16>, vector<8x128xf32> -> vector<8x128xf32>
    %c0_13 = arith.constant 0 : index
    %c0_14 = arith.constant 0 : index
    %17 = vector.load %arg3[%c0_13, %c0_14] : memref<5x256xf32, #tpu.memory_space<vmem>>, vector<5x256xf32>
    %cst_15 = arith.constant dense<0.000000e+00> : vector<8x256xf32>
    %18 = tpu.matmul %0, %17, %cst_15 {dimension_numbers = #tpu.dot_dimension_numbers<[1], [0], [0], [1], [0, 0, 1, 1], [], []>} : vector<8x5xf32>, vector<5x256xf32>, vector<8x256xf32> -> vector<8x256xf32>
    %19 = arith.truncf %18 : vector<8x256xf32> to vector<8x256xbf16>
    %cst_16 = arith.constant 0.000000e+00 : bf16
    %20 = vector.broadcast %cst_16 : bf16 to vector<8x256xbf16>
    %21 = arith.maximumf %19, %20 : vector<8x256xbf16>
    %c0_17 = arith.constant 0 : index
    %c0_18 = arith.constant 0 : index
    %22 = vector.load %arg6[%c0_17, %c0_18] : memref<256x256xbf16, #tpu.memory_space<vmem>>, vector<256x256xbf16>
    %cst_19 = arith.constant dense<0.000000e+00> : vector<8x256xf32>
    %23 = tpu.matmul %21, %22, %cst_19 {dimension_numbers = #tpu.dot_dimension_numbers<[1], [0], [0], [1], [0, 0, 1, 1], [], []>} : vector<8x256xbf16>, vector<256x256xbf16>, vector<8x256xf32> -> vector<8x256xf32>
    %24 = arith.truncf %23 : vector<8x256xf32> to vector<8x256xbf16>
    %c0_20 = arith.constant 0 : index
    %c0_21 = arith.constant 0 : index
    %25 = vector.load %arg7[%c0_20, %c0_21] : memref<1x256xf32, #tpu.memory_space<vmem>>, vector<1x256xf32>
    %26 = arith.truncf %25 : vector<1x256xf32> to vector<1x256xbf16>
    %27 = vector.broadcast %26 : vector<1x256xbf16> to vector<8x256xbf16>
    %28 = arith.addf %24, %27 : vector<8x256xbf16>
    %cst_22 = arith.constant 0.000000e+00 : bf16
    %29 = vector.broadcast %cst_22 : bf16 to vector<8x256xbf16>
    %30 = arith.maximumf %28, %29 : vector<8x256xbf16>
    %c0_23 = arith.constant 0 : index
    %c0_24 = arith.constant 0 : index
    %31 = vector.load %arg9[%c0_23, %c0_24] : memref<256x128xbf16, #tpu.memory_space<vmem>>, vector<256x128xbf16>
    %cst_25 = arith.constant dense<0.000000e+00> : vector<8x128xf32>
    %32 = tpu.matmul %30, %31, %cst_25 {dimension_numbers = #tpu.dot_dimension_numbers<[1], [0], [0], [1], [0, 0, 1, 1], [], []>} : vector<8x256xbf16>, vector<256x128xbf16>, vector<8x128xf32> -> vector<8x128xf32>
    %33 = arith.addf %16, %32 : vector<8x128xf32>
    %c0_26 = arith.constant 0 : index
    %c0_27 = arith.constant 0 : index
    %34 = vector.load %arg10[%c0_26, %c0_27] : memref<1x128xf32, #tpu.memory_space<vmem>>, vector<1x128xf32>
    %35 = vector.broadcast %34 : vector<1x128xf32> to vector<8x128xf32>
    %36 = arith.addf %33, %35 : vector<8x128xf32>
    %c0_28 = arith.constant 0 : index
    %c0_29 = arith.constant 0 : index
    %37 = vector.load %arg11[%c0_28, %c0_29] : memref<8x128xf32, #tpu.memory_space<vmem>>, vector<8x128xf32>
    tpu.vector_store %arg11[%c0_28, %c0_29], %36 {strides = array<i32>} : memref<8x128xf32, #tpu.memory_space<vmem>>, vector<8x128xf32>,
    return
  }
  func.func @transform_0(%arg0: i32) -> (i32, i32) {
    %c0_i32 = arith.constant 0 : i32
    %c0_i32_0 = arith.constant 0 : i32
    return %arg0, %c0_i32 : i32, i32
  }
  func.func @transform_1(%arg0: i32) -> (i32, i32) {
    %c0_i32 = arith.constant 0 : i32
    %c0_i32_0 = arith.constant 0 : i32
    %c0_i32_1 = arith.constant 0 : i32
    return %c0_i32, %c0_i32_0 : i32, i32
  }
  func.func @transform_2(%arg0: i32) -> (i32, i32) {
    %c0_i32 = arith.constant 0 : i32
    %c0_i32_0 = arith.constant 0 : i32
    %c0_i32_1 = arith.constant 0 : i32
    return %c0_i32, %c0_i32_0 : i32, i32
  }
  func.func @transform_3(%arg0: i32) -> (i32, i32) {
    %c0_i32 = arith.constant 0 : i32
    %c0_i32_0 = arith.constant 0 : i32
    %c0_i32_1 = arith.constant 0 : i32
    return %c0_i32, %c0_i32_0 : i32, i32
  }
  func.func @transform_4(%arg0: i32) -> (i32, i32) {
    %c0_i32 = arith.constant 0 : i32
    %c0_i32_0 = arith.constant 0 : i32
    %c0_i32_1 = arith.constant 0 : i32
    return %c0_i32, %c0_i32_0 : i32, i32
  }
  func.func @transform_5(%arg0: i32) -> (i32, i32) {
    %c0_i32 = arith.constant 0 : i32
    %c0_i32_0 = arith.constant 0 : i32
    %c0_i32_1 = arith.constant 0 : i32
    return %c0_i32, %c0_i32_0 : i32, i32
  }
  func.func @transform_6(%arg0: i32) -> (i32, i32) {
    %c0_i32 = arith.constant 0 : i32
    %c0_i32_0 = arith.constant 0 : i32
    %c0_i32_1 = arith.constant 0 : i32
    return %c0_i32, %c0_i32_0 : i32, i32
  }
  func.func @transform_7(%arg0: i32) -> (i32, i32) {
    %c0_i32 = arith.constant 0 : i32
    %c0_i32_0 = arith.constant 0 : i32
    %c0_i32_1 = arith.constant 0 : i32
    return %c0_i32, %c0_i32_0 : i32, i32
  }
  func.func @transform_8(%arg0: i32) -> (i32, i32) {
    %c0_i32 = arith.constant 0 : i32
    %c0_i32_0 = arith.constant 0 : i32
    %c0_i32_1 = arith.constant 0 : i32
    return %c0_i32, %c0_i32_0 : i32, i32
  }
  func.func @transform_9(%arg0: i32) -> (i32, i32) {
    %c0_i32 = arith.constant 0 : i32
    %c0_i32_0 = arith.constant 0 : i32
    %c0_i32_1 = arith.constant 0 : i32
    return %c0_i32, %c0_i32_0 : i32, i32
  }
  func.func @transform_10(%arg0: i32) -> (i32, i32) {
    %c0_i32 = arith.constant 0 : i32
    %c0_i32_0 = arith.constant 0 : i32
    return %arg0, %c0_i32 : i32, i32
  }
}

</mosaic_0001>

<llo_original>
// kernel: critic_forward.1
$region0: #{critic_forward.1}
  #allocation0 [shape = 'u32[]', space=smem, size = 0x4, offset = 0x4, fixed_abs, tag = 'smem constant byte address 0x4 - core index']
  #allocation1 [shape = 'u32[144,128]{1,0:T(1,128)}', space=vmem, size = 0x12000, scoped, tag = 'internal scratch']
  %s0 = inlined_call_operand.vmem [shape: f32[8,5], index: 0, kind: input, shape index: {}]
  %s1 = inlined_call_operand.vmem [shape: f32[5,256], index: 1, kind: input, shape index: {}]
  %s2 = inlined_call_operand.vmem [shape: f32[5,256], index: 2, kind: input, shape index: {}]
  %s3 = inlined_call_operand.hbm [shape: bf16[256,256], index: 3, kind: input, shape index: {}]
  %s4 = inlined_call_operand.vmem [shape: f32[1,256], index: 4, kind: input, shape index: {}]
  %s5 = inlined_call_operand.hbm [shape: bf16[256,256], index: 5, kind: input, shape index: {}]
  %s6 = inlined_call_operand.vmem [shape: f32[1,256], index: 6, kind: input, shape index: {}]
  %s7 = inlined_call_operand.hbm [shape: bf16[256,128], index: 7, kind: input, shape index: {}]
  %s8 = inlined_call_operand.hbm [shape: bf16[256,128], index: 8, kind: input, shape index: {}]
  %s9 = inlined_call_operand.vmem [shape: f32[1,128], index: 9, kind: input, shape index: {}]
  %s10 = inlined_call_operand.vmem [shape: f32[8,128], index: 10, kind: output, shape index: {}]
  %s11 = sld [smem:[#allocation0]]
  $region66: #{critic_forward.1} parent=0
    _
  %s13 = ssub.s32 1, %s11
  %s14 = scalar_select 0, %s13, %s11
  $region1: #{critic_forward.1} parent=0
    #allocation2 [shape = 'u8[131072]{0}', space=vmem, size = 0x20000, scoped, tag = 'input window, operand 3, single buffered']
    #allocation3 [shape = 's32[1]{0}', space=sflag, size = 0x4, scoped, tag = 'scoped memory for critic_forward.1']
    #allocation4 [shape = 'u8[131072]{0}', space=vmem, size = 0x20000, scoped, tag = 'input window, operand 5, single buffered']
    #allocation5 [shape = 's32[1]{0}', space=sflag, size = 0x4, scoped, tag = 'scoped memory for critic_forward.1']
    #allocation6 [shape = 'u8[65536]{0}', space=vmem, size = 0x10000, scoped, tag = 'input window, operand 7, single buffered']
    #allocation7 [shape = 'u8[65536]{0}', space=vmem, size = 0x10000, scoped, tag = 'input window, operand 8, single buffered']
    #allocation8 [shape = 's32[1]{0}', space=sflag, size = 0x4, scoped, tag = 'scoped memory for critic_forward.1']
    %15 = vsyncpa [#allocation3], 0
    %16 = vsyncpa [#allocation5], 0
    %17 = vsyncpa [#allocation8], 0
    // Predicated region
    $region2: #{critic_forward.1} parent=1 // pred_check
      _
    $region3: #{critic_forward.1} parent=1 // pred_check_branch
      %19 = sbr.rel (0) target = $region5
    $region4: #{critic_forward.1} parent=1 // pred_region
      _
    $region5: #{critic_forward.1} parent=1 // pred_fallthru
      _
    // Predicated region
    $region6: #{critic_forward.1} parent=1 // pred_check
      _
    $region7: #{critic_forward.1} parent=1 // pred_check_branch
      %21 = sbr.rel (0) target = $region9
    $region8: #{critic_forward.1} parent=1 // pred_region
      _
    $region9: #{critic_forward.1} parent=1 // pred_fallthru
      _
    // Predicated region
    $region10: #{critic_forward.1} parent=1 // pred_check
      _
    $region11: #{critic_forward.1} parent=1 // pred_check_branch
      %23 = sbr.rel (0) target = $region13
    $region12: #{critic_forward.1} parent=1 // pred_region
      _
    $region13: #{critic_forward.1} parent=1 // pred_fallthru
      _
    // Predicated region
    $region14: #{critic_forward.1} parent=1 // pred_check
      _
    $region15: #{critic_forward.1} parent=1 // pred_check_branch
      %25 = sbr.rel (0) target = $region17
    $region16: #{critic_forward.1} parent=1 // pred_region
      %s27 = ssub.s32 4096, 4096
      %28 = vsyncadd [#allocation3], %s27
      %s29 = sshll.u32 [#allocation2], 4
      %s30 = int_to_ptr.vmem [resolvable:$true] %s29
      %35 = dma.hbm_to_vmem [thread:$0]  %s3, 4096, %s30, [#allocation3], 128, 128, 8
    $region17: #{critic_forward.1} parent=1 // pred_fallthru
      _
    // Predicated region
    $region18: #{critic_forward.1} parent=1 // pred_check
      _
    $region19: #{critic_forward.1} parent=1 // pred_check_branch
      %37 = sbr.rel (0) target = $region21
    $region20: #{critic_forward.1} parent=1 // pred_region
      _
    $region21: #{critic_forward.1} parent=1 // pred_fallthru
      _
    // Predicated region
    $region22: #{critic_forward.1} parent=1 // pred_check
      _
    $region23: #{critic_forward.1} parent=1 // pred_check_branch
      %39 = sbr.rel (0) target = $region25
    $region24: #{critic_forward.1} parent=1 // pred_region
      %s41 = ssub.s32 4096, 4096
      %42 = vsyncadd [#allocation5], %s41
      %s43 = sshll.u32 [#allocation4], 4
      %s44 = int_to_ptr.vmem [resolvable:$true] %s43
      %49 = dma.hbm_to_vmem [thread:$0]  %s5, 4096, %s44, [#allocation5], 128, 128, 8
    $region25: #{critic_forward.1} parent=1 // pred_fallthru
      _
    // Predicated region
    $region26: #{critic_forward.1} parent=1 // pred_check
      _
    $region27: #{critic_forward.1} parent=1 // pred_check_branch
      %51 = sbr.rel (0) target = $region29
    $region28: #{critic_forward.1} parent=1 // pred_region
      _
    $region29: #{critic_forward.1} parent=1 // pred_fallthru
      _
    // Predicated region
    $region30: #{critic_forward.1} parent=1 // pred_check
      _
    $region31: #{critic_forward.1} parent=1 // pred_check_branch
      %53 = sbr.rel (0) target = $region33
    $region32: #{critic_forward.1} parent=1 // pred_region
      %s55 = ssub.s32 2048, 2048
      %56 = vsyncadd [#allocation5], %s55
      %s57 = sshll.u32 [#allocation6], 4
      %s58 = int_to_ptr.vmem [resolvable:$true] %s57
      %63 = dma.hbm_to_vmem [thread:$0]  %s7, 2048, %s58, [#allocation5], 64, 64, 4
    $region33: #{critic_forward.1} parent=1 // pred_fallthru
      _
    // Predicated region
    $region34: #{critic_forward.1} parent=1 // pred_check
      _
    $region35: #{critic_forward.1} parent=1 // pred_check_branch
      %65 = sbr.rel (0) target = $region37
    $region36: #{critic_forward.1} parent=1 // pred_region
      %s67 = ssub.s32 2048, 2048
      %68 = vsyncadd [#allocation8], %s67
      %s69 = sshll.u32 [#allocation7], 4
      %s70 = int_to_ptr.vmem [resolvable:$true] %s69
      %75 = dma.hbm_to_vmem [thread:$0]  %s8, 2048, %s70, [#allocation8], 64, 64, 4
    $region37: #{critic_forward.1} parent=1 // pred_fallthru
      _
    // Predicated region
    $region38: #{critic_forward.1} parent=1 // pred_check
      _
    $region39: #{critic_forward.1} parent=1 // pred_check_branch
      %77 = sbr.rel (0) target = $region41
    $region40: #{critic_forward.1} parent=1 // pred_region
      _
    $region41: #{critic_forward.1} parent=1 // pred_fallthru
      _
    // Predicated region
    $region42: #{critic_forward.1} parent=1 // pred_check
      _
    $region43: #{critic_forward.1} parent=1 // pred_check_branch
      %79 = sbr.rel (0) target = $region45
    $region44: #{critic_forward.1} parent=1 // pred_region
      %80 = dma.done [#allocation3], 4096
    $region45: #{critic_forward.1} parent=1 // pred_fallthru
      _
    // Predicated region
    $region46: #{critic_forward.1} parent=1 // pred_check
      _
    $region47: #{critic_forward.1} parent=1 // pred_check_branch
      %82 = sbr.rel (0) target = $region49
    $region48: #{critic_forward.1} parent=1 // pred_region
      %83 = dma.done [#allocation5], 4096
    $region49: #{critic_forward.1} parent=1 // pred_fallthru
      _
    // Predicated region
    $region50: #{critic_forward.1} parent=1 // pred_check
      _
    $region51: #{critic_forward.1} parent=1 // pred_check_branch
      %85 = sbr.rel (0) target = $region53
    $region52: #{critic_forward.1} parent=1 // pred_region
      %86 = dma.done [#allocation5], 2048
    $region53: #{critic_forward.1} parent=1 // pred_fallthru
      _
    // Predicated region
    $region54: #{critic_forward.1} parent=1 // pred_check
      _
    $region55: #{critic_forward.1} parent=1 // pred_check_branch
      %88 = sbr.rel (0) target = $region57
    $region56: #{critic_forward.1} parent=1 // pred_region
      %89 = dma.done [#allocation8], 2048
    $region57: #{critic_forward.1} parent=1 // pred_fallthru
      _
    %v91 = vld [vmem:[%s0] sm:$0xff]
    %v92 = vld [vmem:[%s1] sm:$0x1f]
    %v93 = vld [vmem:[%s1 + $0x8] sm:$0x1f]
    %vm94 = vcmask 39936
    %v96 = vsel %vm94, %v91, 0
    %vm98 = vcmask 1044480
    %v100 = vsel %vm98, %v92, 0
    %v103 = vsel %vm98, %v93, 0
    %105 = vmatprep.subr.mxu0 0.0
    %106 = vmatpush1.msra.mxu0 0.0
    %107 = vmatprep.subr.mxu0 0.0
    %108 = vmatpush1.msra.mxu0 0.0
    %109 = vmatprep.subr.mxu0 0.0
    %110 = vmatpush1.msra.mxu0 0.0
    %111 = vmatprep.subr.mxu0 0.0
    %112 = vmatpush1.msra.mxu0 0.0
    %113 = vmatprep.subr.mxu0 0.0
    %114 = vmatpush1.msra.mxu0 0.0
    %115 = vmatprep.subr.mxu0 0.0
    %116 = vmatpush1.msra.mxu0 0.0
    %117 = vmatprep.subr.mxu0 0.0
    %118 = vmatpush1.msra.mxu0 0.0
    %119 = vmatprep.subr.mxu0 0.0
    %120 = vmatpush1.msra.mxu0 0.0
    %121 = vmatprep.subr.mxu0 0.0
    %122 = vmatpush1.msra.mxu0 0.0
    %123 = vmatprep.subr.mxu0 0.0
    %124 = vmatpush1.msra.mxu0 0.0
    %125 = vmatprep.subr.mxu0 0.0
    %126 = vmatpush1.msra.mxu0 0.0
    %127 = vmatprep.subr.mxu0 0.0
    %128 = vmatpush1.msra.mxu0 0.0
    %129 = vmatprep.subr.mxu0 0.0
    %130 = vmatpush1.msra.mxu0 0.0
    %131 = vmatprep.subr.mxu0 0.0
    %132 = vmatpush1.msra.mxu0 0.0
    %133 = vmatprep.subr.mxu0 0.0
    %134 = vmatpush1.msra.mxu0 0.0
    %135 = vmatprep.subr.mxu0 %v103
    %136 = vmatpush1.msra.mxu0 %v100
    %137 = vmatprep.subr.mxu0 0.0
    %138 = vmatpush2.msra.mxu0 0.0
    %139 = vmatprep.subr.mxu0 0.0
    %140 = vmatpush2.msra.mxu0 0.0
    %141 = vmatprep.subr.mxu0 0.0
    %142 = vmatpush2.msra.mxu0 0.0
    %143 = vmatprep.subr.mxu0 0.0
    %144 = vmatpush2.msra.mxu0 0.0
    %145 = vmatprep.subr.mxu0 0.0
    %146 = vmatpush2.msra.mxu0 0.0
    %147 = vmatprep.subr.mxu0 0.0
    %148 = vmatpush2.msra.mxu0 0.0
    %149 = vmatprep.subr.mxu0 0.0
    %150 = vmatpush2.msra.mxu0 0.0
    %151 = vmatprep.subr.mxu0 0.0
    %152 = vmatpush2.msra.mxu0 0.0
    %153 = vmatprep.subr.mxu0 0.0
    %154 = vmatpush2.msra.mxu0 0.0
    %155 = vmatprep.subr.mxu0 0.0
    %156 = vmatpush2.msra.mxu0 0.0
    %157 = vmatprep.subr.mxu0 0.0
    %158 = vmatpush2.msra.mxu0 0.0
    %159 = vmatprep.subr.mxu0 0.0
    %160 = vmatpush2.msra.mxu0 0.0
    %161 = vmatprep.subr.mxu0 0.0
    %162 = vmatpush2.msra.mxu0 0.0
    %163 = vmatprep.subr.mxu0 0.0
    %164 = vmatpush2.msra.mxu0 0.0
    %165 = vmatprep.subr.mxu0 0.0
    %166 = vmatpush2.msra.mxu0 0.0
    %167 = vmatprep.subr.mxu0 0.0
    %168 = vmatpush2.msra.mxu0 0.0
    %169 = vmatprep.mubr.f32.mxu0 0.0
    %170 = vmatmul.mubr.f32.gmra.mxu0 %v96
    %v171 = vpop.f32.mrf.mxu0
    %v172 = vadd.f32 0.0, %v171
    %v173 = vpop.f32.mrf.mxu0
    %v174 = vadd.f32 0.0, %v173
    %175 = vdwg.mxu0
    %v176 = vpack.c.bf16 %v172, %v172
    %v177 = vpack.c.bf16 %v174, %v174
    %v178 = vmax.bf16 %v176, 0
    %v179 = vmax.bf16 %v177, 0
    %v180 = vld [vmem:[#allocation2] sm:$0xff]
    %v181 = vld [vmem:[#allocation2 + $0x8] sm:$0xff]
    %v182 = vld [vmem:[#allocation2 + $0x10] sm:$0xff]
    %v183 = vld [vmem:[#allocation2 + $0x18] sm:$0xff]
    %v184 = vld [vmem:[#allocation2 + $0x20] sm:$0xff]
    %v185 = vld [vmem:[#allocation2 + $0x28] sm:$0xff]
    %v186 = vld [vmem:[#allocation2 + $0x30] sm:$0xff]
    %v187 = vld [vmem:[#allocation2 + $0x38] sm:$0xff]
    %v188 = vld [vmem:[#allocation2 + $0x40] sm:$0xff]
    %v189 = vld [vmem:[#allocation2 + $0x48] sm:$0xff]
    %v190 = vld [vmem:[#allocation2 + $0x50] sm:$0xff]
    %v191 = vld [vmem:[#allocation2 + $0x58] sm:$0xff]
    %v192 = vld [vmem:[#allocation2 + $0x60] sm:$0xff]
    %v193 = vld [vmem:[#allocation2 + $0x68] sm:$0xff]
    %v194 = vld [vmem:[#allocation2 + $0x70] sm:$0xff]
    %v195 = vld [vmem:[#allocation2 + $0x78] sm:$0xff]
    %v196 = vld [vmem:[#allocation2 + $0x80] sm:$0xff]
    %v197 = vld [vmem:[#allocation2 + $0x88] sm:$0xff]
    %v198 = vld [vmem:[#allocation2 + $0x90] sm:$0xff]
    %v199 = vld [vmem:[#allocation2 + $0x98] sm:$0xff]
    %v200 = vld [vmem:[#allocation2 + $0xa0] sm:$0xff]
    %v201 = vld [vmem:[#allocation2 + $0xa8] sm:$0xff]
    %v202 = vld [vmem:[#allocation2 + $0xb0] sm:$0xff]
    %v203 = vld [vmem:[#allocation2 + $0xb8] sm:$0xff]
    %v204 = vld [vmem:[#allocation2 + $0xc0] sm:$0xff]
    %v205 = vld [vmem:[#allocation2 + $0xc8] sm:$0xff]
    %v206 = vld [vmem:[#allocation2 + $0xd0] sm:$0xff]
    %v207 = vld [vmem:[#allocation2 + $0xd8] sm:$0xff]
    %v208 = vld [vmem:[#allocation2 + $0xe0] sm:$0xff]
    %v209 = vld [vmem:[#allocation2 + $0xe8] sm:$0xff]
    %v210 = vld [vmem:[#allocation2 + $0xf0] sm:$0xff]
    %v211 = vld [vmem:[#allocation2 + $0xf8] sm:$0xff]
    %v244 = vunpack.c.l.b16 %v180
    %v245 = vunpack.c.h.b16 %v180
    %v246 = vunpack.c.l.b16 %v181
    %v247 = vunpack.c.h.b16 %v181
    %v248 = vunpack.c.l.b16 %v182
    %v249 = vunpack.c.h.b16 %v182
    %v250 = vunpack.c.l.b16 %v183
    %v251 = vunpack.c.h.b16 %v183
    %v252 = vunpack.c.l.b16 %v184
    %v253 = vunpack.c.h.b16 %v184
    %v254 = vunpack.c.l.b16 %v185
    %v255 = vunpack.c.h.b16 %v185
    %v256 = vunpack.c.l.b16 %v186
    %v257 = vunpack.c.h.b16 %v186
    %v258 = vunpack.c.l.b16 %v187
    %v259 = vunpack.c.h.b16 %v187
    %v260 = vunpack.c.l.b16 %v188
    %v261 = vunpack.c.h.b16 %v188
    %v262 = vunpack.c.l.b16 %v189
    %v263 = vunpack.c.h.b16 %v189
    %v264 = vunpack.c.l.b16 %v190
    %v265 = vunpack.c.h.b16 %v190
    %v266 = vunpack.c.l.b16 %v191
    %v267 = vunpack.c.h.b16 %v191
    %v268 = vunpack.c.l.b16 %v192
    %v269 = vunpack.c.h.b16 %v192
    %v270 = vunpack.c.l.b16 %v193
    %v271 = vunpack.c.h.b16 %v193
    %v272 = vunpack.c.l.b16 %v194
    %v273 = vunpack.c.h.b16 %v194
    %v274 = vunpack.c.l.b16 %v195
    %v275 = vunpack.c.h.b16 %v195
    %v276 = vunpack.c.l.b16 %v196
    %v277 = vunpack.c.h.b16 %v196
    %v278 = vunpack.c.l.b16 %v197
    %v279 = vunpack.c.h.b16 %v197
    %v280 = vunpack.c.l.b16 %v198
    %v281 = vunpack.c.h.b16 %v198
    %v282 = vunpack.c.l.b16 %v199
    %v283 = vunpack.c.h.b16 %v199
    %v284 = vunpack.c.l.b16 %v200
    %v285 = vunpack.c.h.b16 %v200
    %v286 = vunpack.c.l.b16 %v201
    %v287 = vunpack.c.h.b16 %v201
    %v288 = vunpack.c.l.b16 %v202
    %v289 = vunpack.c.h.b16 %v202
    %v290 = vunpack.c.l.b16 %v203
    %v291 = vunpack.c.h.b16 %v203
    %v292 = vunpack.c.l.b16 %v204
    %v293 = vunpack.c.h.b16 %v204
    %v294 = vunpack.c.l.b16 %v205
    %v295 = vunpack.c.h.b16 %v205
    %v296 = vunpack.c.l.b16 %v206
    %v297 = vunpack.c.h.b16 %v206
    %v298 = vunpack.c.l.b16 %v207
    %v299 = vunpack.c.h.b16 %v207
    %v300 = vunpack.c.l.b16 %v208
    %v301 = vunpack.c.h.b16 %v208
    %v302 = vunpack.c.l.b16 %v209
    %v303 = vunpack.c.h.b16 %v209
    %v304 = vunpack.c.l.b16 %v210
    %v305 = vunpack.c.h.b16 %v210
    %v306 = vunpack.c.l.b16 %v211
    %v307 = vunpack.c.h.b16 %v211
    %v308 = vpack.c.b16 %v246, %v244
    %v309 = vpack.c.b16 %v247, %v245
    %v310 = vpack.c.b16 %v250, %v248
    %v311 = vpack.c.b16 %v251, %v249
    %v312 = vpack.c.b16 %v254, %v252
    %v313 = vpack.c.b16 %v255, %v253
    %v314 = vpack.c.b16 %v258, %v256
    %v315 = vpack.c.b16 %v259, %v257
    %v316 = vpack.c.b16 %v262, %v260
    %v317 = vpack.c.b16 %v263, %v261
    %v318 = vpack.c.b16 %v266, %v264
    %v319 = vpack.c.b16 %v267, %v265
    %v320 = vpack.c.b16 %v270, %v268
    %v321 = vpack.c.b16 %v271, %v269
    %v322 = vpack.c.b16 %v274, %v272
    %v323 = vpack.c.b16 %v275, %v273
    %v324 = vpack.c.b16 %v278, %v276
    %v325 = vpack.c.b16 %v279, %v277
    %v326 = vpack.c.b16 %v282, %v280
    %v327 = vpack.c.b16 %v283, %v281
    %v328 = vpack.c.b16 %v286, %v284
    %v329 = vpack.c.b16 %v287, %v285
    %v330 = vpack.c.b16 %v290, %v288
    %v331 = vpack.c.b16 %v291, %v289
    %v332 = vpack.c.b16 %v294, %v292
    %v333 = vpack.c.b16 %v295, %v293
    %v334 = vpack.c.b16 %v298, %v296
    %v335 = vpack.c.b16 %v299, %v297
    %v336 = vpack.c.b16 %v302, %v300
    %v337 = vpack.c.b16 %v303, %v301
    %v338 = vpack.c.b16 %v306, %v304
    %v339 = vpack.c.b16 %v307, %v305
    %372 = vmatprep.subr.bf16.mxu0 %v323
    %373 = vmatpush1.bf16.msra.mxu0 %v322
    %374 = vmatprep.subr.bf16.mxu0 %v321
    %375 = vmatpush1.bf16.msra.mxu0 %v320
    %376 = vmatprep.subr.bf16.mxu0 %v319
    %377 = vmatpush1.bf16.msra.mxu0 %v318
    %378 = vmatprep.subr.bf16.mxu0 %v317
    %379 = vmatpush1.bf16.msra.mxu0 %v316
    %380 = vmatprep.subr.bf16.mxu0 %v315
    %381 = vmatpush1.bf16.msra.mxu0 %v314
    %382 = vmatprep.subr.bf16.mxu0 %v313
    %383 = vmatpush1.bf16.msra.mxu0 %v312
    %384 = vmatprep.subr.bf16.mxu0 %v311
    %385 = vmatpush1.bf16.msra.mxu0 %v310
    %386 = vmatprep.subr.bf16.mxu0 %v309
    %387 = vmatpush1.bf16.msra.mxu0 %v308
    %388 = vmatprep.subr.bf16.mxu0 %v339
    %389 = vmatpush2.bf16.msra.mxu0 %v338
    %390 = vmatprep.subr.bf16.mxu0 %v337
    %391 = vmatpush2.bf16.msra.mxu0 %v336
    %392 = vmatprep.subr.bf16.mxu0 %v335
    %393 = vmatpush2.bf16.msra.mxu0 %v334
    %394 = vmatprep.subr.bf16.mxu0 %v333
    %395 = vmatpush2.bf16.msra.mxu0 %v332
    %396 = vmatprep.subr.bf16.mxu0 %v331
    %397 = vmatpush2.bf16.msra.mxu0 %v330
    %398 = vmatprep.subr.bf16.mxu0 %v329
    %399 = vmatpush2.bf16.msra.mxu0 %v328
    %400 = vmatprep.subr.bf16.mxu0 %v327
    %401 = vmatpush2.bf16.msra.mxu0 %v326
    %402 = vmatprep.subr.bf16.mxu0 %v325
    %403 = vmatpush2.bf16.msra.mxu0 %v324
    %404 = vmatprep.mubr.bf16.mxu0 %v179
    %405 = vmatmul.mubr.bf16.gmra.mxu0 %v178
    %v406 = vpop.f32.mrf.mxu0
    %v407 = vadd.f32 0.0, %v406
    %v408 = vpop.f32.mrf.mxu0
    %v409 = vadd.f32 0.0, %v408
    %v410 = vpop.f32.mrf.mxu0
    %v411 = vpop.f32.mrf.mxu0
    %412 = vdwg.mxu0
    %v413 = vpack.c.bf16 %v407, %v407
    %v414 = vpack.c.bf16 %v409, %v409
    %v415 = vld [vmem:[%s4] sm:$0x3]
    %v417 = vlaneseq
    %v418 = vshrl.u32 %v417, 7
    %v419 = vsub.s32 0, %v418
    %v420 = vrot.slane %v415, %v419
    %v421 = vlaneseq
    %v422 = vshrl.u32 %v421, 7
    %v423 = vsub.s32 1, %v422
    %v424 = vrot.slane %v415, %v423
    %v427 = vpack.c.bf16 %v420, %v420
    %v428 = vpack.c.bf16 %v424, %v424
    %v430 = vpack.i.b16 %v427, %v427
    %v432 = vlaneseq
    %v433 = vshrl.u32 %v432, 7
    %v434 = vsub.s32 0, %v433
    %v435 = vrot.slane %v430, %v434
    %v437 = vpack.i.b16 %v428, %v428
    %v439 = vlaneseq
    %v440 = vshrl.u32 %v439, 7
    %v441 = vsub.s32 0, %v440
    %v442 = vrot.slane %v437, %v441
    %v443 = vadd.bf16 %v413, %v435
    %v444 = vadd.bf16 %v414, %v442
    %v445 = vmax.bf16 %v443, 0
    %v446 = vmax.bf16 %v444, 0
    %v447 = vld [vmem:[#allocation6] sm:$0xf]
    %v448 = vld [vmem:[#allocation6 + $0x4] sm:$0xf]
    %v449 = vld [vmem:[#allocation6 + $0x8] sm:$0xf]
    %v450 = vld [vmem:[#allocation6 + $0xc] sm:$0xf]
    %v451 = vld [vmem:[#allocation6 + $0x10] sm:$0xf]
    %v452 = vld [vmem:[#allocation6 + $0x14] sm:$0xf]
    %v453 = vld [vmem:[#allocation6 + $0x18] sm:$0xf]
    %v454 = vld [vmem:[#allocation6 + $0x1c] sm:$0xf]
    %v455 = vld [vmem:[#allocation6 + $0x20] sm:$0xf]
    %v456 = vld [vmem:[#allocation6 + $0x24] sm:$0xf]
    %v457 = vld [vmem:[#allocation6 + $0x28] sm:$0xf]
    %v458 = vld [vmem:[#allocation6 + $0x2c] sm:$0xf]
    %v459 = vld [vmem:[#allocation6 + $0x30] sm:$0xf]
    %v460 = vld [vmem:[#allocation6 + $0x34] sm:$0xf]
    %v461 = vld [vmem:[#allocation6 + $0x38] sm:$0xf]
    %v462 = vld [vmem:[#allocation6 + $0x3c] sm:$0xf]
    %v463 = vld [vmem:[#allocation6 + $0x40] sm:$0xf]
    %v464 = vld [vmem:[#allocation6 + $0x44] sm:$0xf]
    %v465 = vld [vmem:[#allocation6 + $0x48] sm:$0xf]
    %v466 = vld [vmem:[#allocation6 + $0x4c] sm:$0xf]
    %v467 = vld [vmem:[#allocation6 + $0x50] sm:$0xf]
    %v468 = vld [vmem:[#allocation6 + $0x54] sm:$0xf]
    %v469 = vld [vmem:[#allocation6 + $0x58] sm:$0xf]
    %v470 = vld [vmem:[#allocation6 + $0x5c] sm:$0xf]
    %v471 = vld [vmem:[#allocation6 + $0x60] sm:$0xf]
    %v472 = vld [vmem:[#allocation6 + $0x64] sm:$0xf]
    %v473 = vld [vmem:[#allocation6 + $0x68] sm:$0xf]
    %v474 = vld [vmem:[#allocation6 + $0x6c] sm:$0xf]
    %v475 = vld [vmem:[#allocation6 + $0x70] sm:$0xf]
    %v476 = vld [vmem:[#allocation6 + $0x74] sm:$0xf]
    %v477 = vld [vmem:[#allocation6 + $0x78] sm:$0xf]
    %v478 = vld [vmem:[#allocation6 + $0x7c] sm:$0xf]
    %v479 = vld [vmem:[%s2] sm:$0x1f]
    %v480 = vld [vmem:[%s2 + $0x8] sm:$0x1f]
    %v482 = vsel %vm98, %v479, 0
    %v485 = vsel %vm98, %v480, 0
    %487 = vmatprep.subr.mxu0 0.0
    %488 = vmatpush1.msra.mxu0 0.0
    %489 = vmatprep.subr.mxu0 0.0
    %490 = vmatpush1.msra.mxu0 0.0
    %491 = vmatprep.subr.mxu0 0.0
    %492 = vmatpush1.msra.mxu0 0.0
    %493 = vmatprep.subr.mxu0 0.0
    %494 = vmatpush1.msra.mxu0 0.0
    %495 = vmatprep.subr.mxu0 0.0
    %496 = vmatpush1.msra.mxu0 0.0
    %497 = vmatprep.subr.mxu0 0.0
    %498 = vmatpush1.msra.mxu0 0.0
    %499 = vmatprep.subr.mxu0 0.0
    %500 = vmatpush1.msra.mxu0 0.0
    %501 = vmatprep.subr.mxu0 0.0
    %502 = vmatpush1.msra.mxu0 0.0
    %503 = vmatprep.subr.mxu0 0.0
    %504 = vmatpush1.msra.mxu0 0.0
    %505 = vmatprep.subr.mxu0 0.0
    %506 = vmatpush1.msra.mxu0 0.0
    %507 = vmatprep.subr.mxu0 0.0
    %508 = vmatpush1.msra.mxu0 0.0
    %509 = vmatprep.subr.mxu0 0.0
    %510 = vmatpush1.msra.mxu0 0.0
    %511 = vmatprep.subr.mxu0 0.0
    %512 = vmatpush1.msra.mxu0 0.0
    %513 = vmatprep.subr.mxu0 0.0
    %514 = vmatpush1.msra.mxu0 0.0
    %515 = vmatprep.subr.mxu0 0.0
    %516 = vmatpush1.msra.mxu0 0.0
    %517 = vmatprep.subr.mxu0 %v485
    %518 = vmatpush1.msra.mxu0 %v482
    %519 = vmatprep.subr.mxu0 0.0
    %520 = vmatpush2.msra.mxu0 0.0
    %521 = vmatprep.subr.mxu0 0.0
    %522 = vmatpush2.msra.mxu0 0.0
    %523 = vmatprep.subr.mxu0 0.0
    %524 = vmatpush2.msra.mxu0 0.0
    %525 = vmatprep.subr.mxu0 0.0
    %526 = vmatpush2.msra.mxu0 0.0
    %527 = vmatprep.subr.mxu0 0.0
    %528 = vmatpush2.msra.mxu0 0.0
    %529 = vmatprep.subr.mxu0 0.0
    %530 = vmatpush2.msra.mxu0 0.0
    %531 = vmatprep.subr.mxu0 0.0
    %532 = vmatpush2.msra.mxu0 0.0
    %533 = vmatprep.subr.mxu0 0.0
    %534 = vmatpush2.msra.mxu0 0.0
    %535 = vmatprep.subr.mxu0 0.0
    %536 = vmatpush2.msra.mxu0 0.0
    %537 = vmatprep.subr.mxu0 0.0
    %538 = vmatpush2.msra.mxu0 0.0
    %539 = vmatprep.subr.mxu0 0.0
    %540 = vmatpush2.msra.mxu0 0.0
    %541 = vmatprep.subr.mxu0 0.0
    %542 = vmatpush2.msra.mxu0 0.0
    %543 = vmatprep.subr.mxu0 0.0
    %544 = vmatpush2.msra.mxu0 0.0
    %545 = vmatprep.subr.mxu0 0.0
    %546 = vmatpush2.msra.mxu0 0.0
    %547 = vmatprep.subr.mxu0 0.0
    %548 = vmatpush2.msra.mxu0 0.0
    %549 = vmatprep.subr.mxu0 0.0
    %550 = vmatpush2.msra.mxu0 0.0
    %551 = vmatprep.mubr.f32.mxu0 0.0
    %552 = vmatmul.mubr.f32.gmra.mxu0 %v96
    %v553 = vpop.f32.mrf.mxu0
    %v554 = vadd.f32 0.0, %v553
    %v555 = vpop.f32.mrf.mxu0
    %v556 = vadd.f32 0.0, %v555
    %557 = vdwg.mxu0
    %v558 = vpack.c.bf16 %v554, %v554
    %v559 = vpack.c.bf16 %v556, %v556
    %v560 = vmax.bf16 %v558, 0
    %v561 = vmax.bf16 %v559, 0
    %v562 = vld [vmem:[#allocation4] sm:$0xff]
    %v563 = vld [vmem:[#allocation4 + $0x8] sm:$0xff]
    %v564 = vld [vmem:[#allocation4 + $0x10] sm:$0xff]
    %v565 = vld [vmem:[#allocation4 + $0x18] sm:$0xff]
    %v566 = vld [vmem:[#allocation4 + $0x20] sm:$0xff]
    %v567 = vld [vmem:[#allocation4 + $0x28] sm:$0xff]
    %v568 = vld [vmem:[#allocation4 + $0x30] sm:$0xff]
    %v569 = vld [vmem:[#allocation4 + $0x38] sm:$0xff]
    %v570 = vld [vmem:[#allocation4 + $0x40] sm:$0xff]
    %v571 = vld [vmem:[#allocation4 + $0x48] sm:$0xff]
    %v572 = vld [vmem:[#allocation4 + $0x50] sm:$0xff]
    %v573 = vld [vmem:[#allocation4 + $0x58] sm:$0xff]
    %v574 = vld [vmem:[#allocation4 + $0x60] sm:$0xff]
    %v575 = vld [vmem:[#allocation4 + $0x68] sm:$0xff]
    %v576 = vld [vmem:[#allocation4 + $0x70] sm:$0xff]
    %v577 = vld [vmem:[#allocation4 + $0x78] sm:$0xff]
    %v578 = vld [vmem:[#allocation4 + $0x80] sm:$0xff]
    %v579 = vld [vmem:[#allocation4 + $0x88] sm:$0xff]
    %v580 = vld [vmem:[#allocation4 + $0x90] sm:$0xff]
    %v581 = vld [vmem:[#allocation4 + $0x98] sm:$0xff]
    %v582 = vld [vmem:[#allocation4 + $0xa0] sm:$0xff]
    %v583 = vld [vmem:[#allocation4 + $0xa8] sm:$0xff]
    %v584 = vld [vmem:[#allocation4 + $0xb0] sm:$0xff]
    %v585 = vld [vmem:[#allocation4 + $0xb8] sm:$0xff]
    %v586 = vld [vmem:[#allocation4 + $0xc0] sm:$0xff]
    %v587 = vld [vmem:[#allocation4 + $0xc8] sm:$0xff]
    %v588 = vld [vmem:[#allocation4 + $0xd0] sm:$0xff]
    %v589 = vld [vmem:[#allocation4 + $0xd8] sm:$0xff]
    %v590 = vld [vmem:[#allocation4 + $0xe0] sm:$0xff]
    %v591 = vld [vmem:[#allocation4 + $0xe8] sm:$0xff]
    %v592 = vld [vmem:[#allocation4 + $0xf0] sm:$0xff]
    %v593 = vld [vmem:[#allocation4 + $0xf8] sm:$0xff]
    %v626 = vunpack.c.l.b16 %v562
    %v627 = vunpack.c.h.b16 %v562
    %v628 = vunpack.c.l.b16 %v563
    %v629 = vunpack.c.h.b16 %v563
    %v630 = vunpack.c.l.b16 %v564
    %v631 = vunpack.c.h.b16 %v564
    %v632 = vunpack.c.l.b16 %v565
    %v633 = vunpack.c.h.b16 %v565
    %v634 = vunpack.c.l.b16 %v566
    %v635 = vunpack.c.h.b16 %v566
    %v636 = vunpack.c.l.b16 %v567
    %v637 = vunpack.c.h.b16 %v567
    %v638 = vunpack.c.l.b16 %v568
    %v639 = vunpack.c.h.b16 %v568
    %v640 = vunpack.c.l.b16 %v569
    %v641 = vunpack.c.h.b16 %v569
    %v642 = vunpack.c.l.b16 %v570
    %v643 = vunpack.c.h.b16 %v570
    %v644 = vunpack.c.l.b16 %v571
    %v645 = vunpack.c.h.b16 %v571
    %v646 = vunpack.c.l.b16 %v572
    %v647 = vunpack.c.h.b16 %v572
    %v648 = vunpack.c.l.b16 %v573
    %v649 = vunpack.c.h.b16 %v573
    %v650 = vunpack.c.l.b16 %v574
    %v651 = vunpack.c.h.b16 %v574
    %v652 = vunpack.c.l.b16 %v575
    %v653 = vunpack.c.h.b16 %v575
    %v654 = vunpack.c.l.b16 %v576
    %v655 = vunpack.c.h.b16 %v576
    %v656 = vunpack.c.l.b16 %v577
    %v657 = vunpack.c.h.b16 %v577
    %v658 = vunpack.c.l.b16 %v578
    %v659 = vunpack.c.h.b16 %v578
    %v660 = vunpack.c.l.b16 %v579
    %v661 = vunpack.c.h.b16 %v579
    %v662 = vunpack.c.l.b16 %v580
    %v663 = vunpack.c.h.b16 %v580
    %v664 = vunpack.c.l.b16 %v581
    %v665 = vunpack.c.h.b16 %v581
    %v666 = vunpack.c.l.b16 %v582
    %v667 = vunpack.c.h.b16 %v582
    %v668 = vunpack.c.l.b16 %v583
    %v669 = vunpack.c.h.b16 %v583
    %v670 = vunpack.c.l.b16 %v584
    %v671 = vunpack.c.h.b16 %v584
    %v672 = vunpack.c.l.b16 %v585
    %v673 = vunpack.c.h.b16 %v585
    %v674 = vunpack.c.l.b16 %v586
    %v675 = vunpack.c.h.b16 %v586
    %v676 = vunpack.c.l.b16 %v587
    %v677 = vunpack.c.h.b16 %v587
    %v678 = vunpack.c.l.b16 %v588
    %v679 = vunpack.c.h.b16 %v588
    %v680 = vunpack.c.l.b16 %v589
    %v681 = vunpack.c.h.b16 %v589
    %v682 = vunpack.c.l.b16 %v590
    %v683 = vunpack.c.h.b16 %v590
    %v684 = vunpack.c.l.b16 %v591
    %v685 = vunpack.c.h.b16 %v591
    %v686 = vunpack.c.l.b16 %v592
    %v687 = vunpack.c.h.b16 %v592
    %v688 = vunpack.c.l.b16 %v593
    %v689 = vunpack.c.h.b16 %v593
    %v690 = vpack.c.b16 %v628, %v626
    %v691 = vpack.c.b16 %v629, %v627
    %v692 = vpack.c.b16 %v632, %v630
    %v693 = vpack.c.b16 %v633, %v631
    %v694 = vpack.c.b16 %v636, %v634
    %v695 = vpack.c.b16 %v637, %v635
    %v696 = vpack.c.b16 %v640, %v638
    %v697 = vpack.c.b16 %v641, %v639
    %v698 = vpack.c.b16 %v644, %v642
    %v699 = vpack.c.b16 %v645, %v643
    %v700 = vpack.c.b16 %v648, %v646
    %v701 = vpack.c.b16 %v649, %v647
    %v702 = vpack.c.b16 %v652, %v650
    %v703 = vpack.c.b16 %v653, %v651
    %v704 = vpack.c.b16 %v656, %v654
    %v705 = vpack.c.b16 %v657, %v655
    %v706 = vpack.c.b16 %v660, %v658
    %v707 = vpack.c.b16 %v661, %v659
    %v708 = vpack.c.b16 %v664, %v662
    %v709 = vpack.c.b16 %v665, %v663
    %v710 = vpack.c.b16 %v668, %v666
    %v711 = vpack.c.b16 %v669, %v667
    %v712 = vpack.c.b16 %v672, %v670
    %v713 = vpack.c.b16 %v673, %v671
    %v714 = vpack.c.b16 %v676, %v674
    %v715 = vpack.c.b16 %v677, %v675
    %v716 = vpack.c.b16 %v680, %v678
    %v717 = vpack.c.b16 %v681, %v679
    %v718 = vpack.c.b16 %v684, %v682
    %v719 = vpack.c.b16 %v685, %v683
    %v720 = vpack.c.b16 %v688, %v686
    %v721 = vpack.c.b16 %v689, %v687
    %754 = vmatprep.subr.bf16.mxu0 %v705
    %755 = vmatpush1.bf16.msra.mxu0 %v704
    %756 = vmatprep.subr.bf16.mxu0 %v703
    %757 = vmatpush1.bf16.msra.mxu0 %v702
    %758 = vmatprep.subr.bf16.mxu0 %v701
    %759 = vmatpush1.bf16.msra.mxu0 %v700
    %760 = vmatprep.subr.bf16.mxu0 %v699
    %761 = vmatpush1.bf16.msra.mxu0 %v698
    %762 = vmatprep.subr.bf16.mxu0 %v697
    %763 = vmatpush1.bf16.msra.mxu0 %v696
    %764 = vmatprep.subr.bf16.mxu0 %v695
    %765 = vmatpush1.bf16.msra.mxu0 %v694
    %766 = vmatprep.subr.bf16.mxu0 %v693
    %767 = vmatpush1.bf16.msra.mxu0 %v692
    %768 = vmatprep.subr.bf16.mxu0 %v691
    %769 = vmatpush1.bf16.msra.mxu0 %v690
    %770 = vmatprep.subr.bf16.mxu0 %v721
    %771 = vmatpush2.bf16.msra.mxu0 %v720
    %772 = vmatprep.subr.bf16.mxu0 %v719
    %773 = vmatpush2.bf16.msra.mxu0 %v718
    %774 = vmatprep.subr.bf16.mxu0 %v717
    %775 = vmatpush2.bf16.msra.mxu0 %v716
    %776 = vmatprep.subr.bf16.mxu0 %v715
    %777 = vmatpush2.bf16.msra.mxu0 %v714
    %778 = vmatprep.subr.bf16.mxu0 %v713
    %779 = vmatpush2.bf16.msra.mxu0 %v712
    %780 = vmatprep.subr.bf16.mxu0 %v711
    %781 = vmatpush2.bf16.msra.mxu0 %v710
    %782 = vmatprep.subr.bf16.mxu0 %v709
    %783 = vmatpush2.bf16.msra.mxu0 %v708
    %784 = vmatprep.subr.bf16.mxu0 %v707
    %785 = vmatpush2.bf16.msra.mxu0 %v706
    %786 = vmatprep.mubr.bf16.mxu0 %v561
    %787 = vmatmul.mubr.bf16.gmra.mxu0 %v560
    %v788 = vpop.f32.mrf.mxu0
    %v789 = vadd.f32 0.0, %v788
    %v790 = vpop.f32.mrf.mxu0
    %v791 = vadd.f32 0.0, %v790
    %v792 = vpop.f32.mrf.mxu0
    %v793 = vpop.f32.mrf.mxu0
    %794 = vdwg.mxu0
    %v795 = vpack.c.bf16 %v789, %v789
    %v796 = vpack.c.bf16 %v791, %v791
    %v797 = vld [vmem:[%s6] sm:$0x3]
    %v799 = vlaneseq
    %v800 = vshrl.u32 %v799, 7
    %v801 = vsub.s32 0, %v800
    %v802 = vrot.slane %v797, %v801
    %v803 = vlaneseq
    %v804 = vshrl.u32 %v803, 7
    %v805 = vsub.s32 1, %v804
    %v806 = vrot.slane %v797, %v805
    %v809 = vpack.c.bf16 %v802, %v802
    %v810 = vpack.c.bf16 %v806, %v806
    %v812 = vpack.i.b16 %v809, %v809
    %v814 = vlaneseq
    %v815 = vshrl.u32 %v814, 7
    %v816 = vsub.s32 0, %v815
    %v817 = vrot.slane %v812, %v816
    %v819 = vpack.i.b16 %v810, %v810
    %v821 = vlaneseq
    %v822 = vshrl.u32 %v821, 7
    %v823 = vsub.s32 0, %v822
    %v824 = vrot.slane %v819, %v823
    %v825 = vadd.bf16 %v795, %v817
    %v826 = vadd.bf16 %v796, %v824
    %v827 = vmax.bf16 %v825, 0
    %v828 = vmax.bf16 %v826, 0
    %v829 = vld [vmem:[#allocation7] sm:$0xf]
    %v830 = vld [vmem:[#allocation7 + $0x4] sm:$0xf]
    %v831 = vld [vmem:[#allocation7 + $0x8] sm:$0xf]
    %v832 = vld [vmem:[#allocation7 + $0xc] sm:$0xf]
    %v833 = vld [vmem:[#allocation7 + $0x10] sm:$0xf]
    %v834 = vld [vmem:[#allocation7 + $0x14] sm:$0xf]
    %v835 = vld [vmem:[#allocation7 + $0x18] sm:$0xf]
    %v836 = vld [vmem:[#allocation7 + $0x1c] sm:$0xf]
    %v837 = vld [vmem:[#allocation7 + $0x20] sm:$0xf]
    %v838 = vld [vmem:[#allocation7 + $0x24] sm:$0xf]
    %v839 = vld [vmem:[#allocation7 + $0x28] sm:$0xf]
    %v840 = vld [vmem:[#allocation7 + $0x2c] sm:$0xf]
    %v841 = vld [vmem:[#allocation7 + $0x30] sm:$0xf]
    %v842 = vld [vmem:[#allocation7 + $0x34] sm:$0xf]
    %v843 = vld [vmem:[#allocation7 + $0x38] sm:$0xf]
    %v844 = vld [vmem:[#allocation7 + $0x3c] sm:$0xf]
    %v845 = vld [vmem:[#allocation7 + $0x40] sm:$0xf]
    %v846 = vld [vmem:[#allocation7 + $0x44] sm:$0xf]
    %v847 = vld [vmem:[#allocation7 + $0x48] sm:$0xf]
    %v848 = vld [vmem:[#allocation7 + $0x4c] sm:$0xf]
    %v849 = vld [vmem:[#allocation7 + $0x50] sm:$0xf]
    %v850 = vld [vmem:[#allocation7 + $0x54] sm:$0xf]
    %v851 = vld [vmem:[#allocation7 + $0x58] sm:$0xf]
    %v852 = vld [vmem:[#allocation7 + $0x5c] sm:$0xf]
    %v853 = vld [vmem:[#allocation7 + $0x60] sm:$0xf]
    %v854 = vld [vmem:[#allocation7 + $0x64] sm:$0xf]
    %v855 = vld [vmem:[#allocation7 + $0x68] sm:$0xf]
    %v856 = vld [vmem:[#allocation7 + $0x6c] sm:$0xf]
    %v857 = vld [vmem:[#allocation7 + $0x70] sm:$0xf]
    %v858 = vld [vmem:[#allocation7 + $0x74] sm:$0xf]
    %v859 = vld [vmem:[#allocation7 + $0x78] sm:$0xf]
    %v860 = vld [vmem:[#allocation7 + $0x7c] sm:$0xf]
    %v893 = vunpack.c.l.b16 %v829
    %v894 = vunpack.c.l.b16 %v830
    %v895 = vunpack.c.l.b16 %v831
    %v896 = vunpack.c.l.b16 %v832
    %v897 = vunpack.c.l.b16 %v833
    %v898 = vunpack.c.l.b16 %v834
    %v899 = vunpack.c.l.b16 %v835
    %v900 = vunpack.c.l.b16 %v836
    %v901 = vunpack.c.l.b16 %v837
    %v902 = vunpack.c.l.b16 %v838
    %v903 = vunpack.c.l.b16 %v839
    %v904 = vunpack.c.l.b16 %v840
    %v905 = vunpack.c.l.b16 %v841
    %v906 = vunpack.c.l.b16 %v842
    %v907 = vunpack.c.l.b16 %v843
    %v908 = vunpack.c.l.b16 %v844
    %v909 = vunpack.c.l.b16 %v845
    %v910 = vunpack.c.l.b16 %v846
    %v911 = vunpack.c.l.b16 %v847
    %v912 = vunpack.c.l.b16 %v848
    %v913 = vunpack.c.l.b16 %v849
    %v914 = vunpack.c.l.b16 %v850
    %v915 = vunpack.c.l.b16 %v851
    %v916 = vunpack.c.l.b16 %v852
    %v917 = vunpack.c.l.b16 %v853
    %v918 = vunpack.c.l.b16 %v854
    %v919 = vunpack.c.l.b16 %v855
    %v920 = vunpack.c.l.b16 %v856
    %v921 = vunpack.c.l.b16 %v857
    %v922 = vunpack.c.l.b16 %v858
    %v923 = vunpack.c.l.b16 %v859
    %v924 = vunpack.c.l.b16 %v860
    %v925 = vpack.c.b16 %v894, %v893
    %v926 = vpack.c.b16 %v896, %v895
    %v927 = vpack.c.b16 %v898, %v897
    %v928 = vpack.c.b16 %v900, %v899
    %v929 = vpack.c.b16 %v902, %v901
    %v930 = vpack.c.b16 %v904, %v903
    %v931 = vpack.c.b16 %v906, %v905
    %v932 = vpack.c.b16 %v908, %v907
    %v933 = vpack.c.b16 %v910, %v909
    %v934 = vpack.c.b16 %v912, %v911
    %v935 = vpack.c.b16 %v914, %v913
    %v936 = vpack.c.b16 %v916, %v915
    %v937 = vpack.c.b16 %v918, %v917
    %v938 = vpack.c.b16 %v920, %v919
    %v939 = vpack.c.b16 %v922, %v921
    %v940 = vpack.c.b16 %v924, %v923
    %957 = vmatprep.subr.bf16.mxu0 0
    %958 = vmatpush1.bf16.msra.mxu0 %v932
    %959 = vmatprep.subr.bf16.mxu0 0
    %960 = vmatpush1.bf16.msra.mxu0 %v931
    %961 = vmatprep.subr.bf16.mxu0 0
    %962 = vmatpush1.bf16.msra.mxu0 %v930
    %963 = vmatprep.subr.bf16.mxu0 0
    %964 = vmatpush1.bf16.msra.mxu0 %v929
    %965 = vmatprep.subr.bf16.mxu0 0
    %966 = vmatpush1.bf16.msra.mxu0 %v928
    %967 = vmatprep.subr.bf16.mxu0 0
    %968 = vmatpush1.bf16.msra.mxu0 %v927
    %969 = vmatprep.subr.bf16.mxu0 0
    %970 = vmatpush1.bf16.msra.mxu0 %v926
    %971 = vmatprep.subr.bf16.mxu0 0
    %972 = vmatpush1.bf16.msra.mxu0 %v925
    %973 = vmatprep.subr.bf16.mxu0 0
    %974 = vmatpush2.bf16.msra.mxu0 %v940
    %975 = vmatprep.subr.bf16.mxu0 0
    %976 = vmatpush2.bf16.msra.mxu0 %v939
    %977 = vmatprep.subr.bf16.mxu0 0
    %978 = vmatpush2.bf16.msra.mxu0 %v938
    %979 = vmatprep.subr.bf16.mxu0 0
    %980 = vmatpush2.bf16.msra.mxu0 %v937
    %981 = vmatprep.subr.bf16.mxu0 0
    %982 = vmatpush2.bf16.msra.mxu0 %v936
    %983 = vmatprep.subr.bf16.mxu0 0
    %984 = vmatpush2.bf16.msra.mxu0 %v935
    %985 = vmatprep.subr.bf16.mxu0 0
    %986 = vmatpush2.bf16.msra.mxu0 %v934
    %987 = vmatprep.subr.bf16.mxu0 0
    %988 = vmatpush2.bf16.msra.mxu0 %v933
    %989 = vmatprep.mubr.bf16.mxu0 %v828
    %990 = vmatmul.mubr.bf16.gmra.mxu0 %v827
    %v991 = vpop.f32.mrf.mxu0
    %v992 = vadd.f32 0.0, %v991
    %v993 = vpop.f32.mrf.mxu0
    %v994 = vpop.f32.mrf.mxu0
    %v995 = vpop.f32.mrf.mxu0
    %996 = vdwg.mxu0
    %v1029 = vunpack.c.l.b16 %v447
    %v1030 = vunpack.c.l.b16 %v448
    %v1031 = vunpack.c.l.b16 %v449
    %v1032 = vunpack.c.l.b16 %v450
    %v1033 = vunpack.c.l.b16 %v451
    %v1034 = vunpack.c.l.b16 %v452
    %v1035 = vunpack.c.l.b16 %v453
    %v1036 = vunpack.c.l.b16 %v454
    %v1037 = vunpack.c.l.b16 %v455
    %v1038 = vunpack.c.l.b16 %v456
    %v1039 = vunpack.c.l.b16 %v457
    %v1040 = vunpack.c.l.b16 %v458
    %v1041 = vunpack.c.l.b16 %v459
    %v1042 = vunpack.c.l.b16 %v460
    %v1043 = vunpack.c.l.b16 %v461
    %v1044 = vunpack.c.l.b16 %v462
    %v1045 = vunpack.c.l.b16 %v463
    %v1046 = vunpack.c.l.b16 %v464
    %v1047 = vunpack.c.l.b16 %v465
    %v1048 = vunpack.c.l.b16 %v466
    %v1049 = vunpack.c.l.b16 %v467
    %v1050 = vunpack.c.l.b16 %v468
    %v1051 = vunpack.c.l.b16 %v469
    %v1052 = vunpack.c.l.b16 %v470
    %v1053 = vunpack.c.l.b16 %v471
    %v1054 = vunpack.c.l.b16 %v472
    %v1055 = vunpack.c.l.b16 %v473
    %v1056 = vunpack.c.l.b16 %v474
    %v1057 = vunpack.c.l.b16 %v475
    %v1058 = vunpack.c.l.b16 %v476
    %v1059 = vunpack.c.l.b16 %v477
    %v1060 = vunpack.c.l.b16 %v478
    %v1061 = vpack.c.b16 %v1030, %v1029
    %v1062 = vpack.c.b16 %v1032, %v1031
    %v1063 = vpack.c.b16 %v1034, %v1033
    %v1064 = vpack.c.b16 %v1036, %v1035
    %v1065 = vpack.c.b16 %v1038, %v1037
    %v1066 = vpack.c.b16 %v1040, %v1039
    %v1067 = vpack.c.b16 %v1042, %v1041
    %v1068 = vpack.c.b16 %v1044, %v1043
    %v1069 = vpack.c.b16 %v1046, %v1045
    %v1070 = vpack.c.b16 %v1048, %v1047
    %v1071 = vpack.c.b16 %v1050, %v1049
    %v1072 = vpack.c.b16 %v1052, %v1051
    %v1073 = vpack.c.b16 %v1054, %v1053
    %v1074 = vpack.c.b16 %v1056, %v1055
    %v1075 = vpack.c.b16 %v1058, %v1057
    %v1076 = vpack.c.b16 %v1060, %v1059
    %1093 = vmatprep.subr.bf16.mxu0 0
    %1094 = vmatpush1.bf16.msra.mxu0 %v1068
    %1095 = vmatprep.subr.bf16.mxu0 0
    %1096 = vmatpush1.bf16.msra.mxu0 %v1067
    %1097 = vmatprep.subr.bf16.mxu0 0
    %1098 = vmatpush1.bf16.msra.mxu0 %v1066
    %1099 = vmatprep.subr.bf16.mxu0 0
    %1100 = vmatpush1.bf16.msra.mxu0 %v1065
    %1101 = vmatprep.subr.bf16.mxu0 0
    %1102 = vmatpush1.bf16.msra.mxu0 %v1064
    %1103 = vmatprep.subr.bf16.mxu0 0
    %1104 = vmatpush1.bf16.msra.mxu0 %v1063
    %1105 = vmatprep.subr.bf16.mxu0 0
    %1106 = vmatpush1.bf16.msra.mxu0 %v1062
    %1107 = vmatprep.subr.bf16.mxu0 0
    %1108 = vmatpush1.bf16.msra.mxu0 %v1061
    %1109 = vmatprep.subr.bf16.mxu0 0
    %1110 = vmatpush2.bf16.msra.mxu0 %v1076
    %1111 = vmatprep.subr.bf16.mxu0 0
    %1112 = vmatpush2.bf16.msra.mxu0 %v1075
    %1113 = vmatprep.subr.bf16.mxu0 0
    %1114 = vmatpush2.bf16.msra.mxu0 %v1074
    %1115 = vmatprep.subr.bf16.mxu0 0
    %1116 = vmatpush2.bf16.msra.mxu0 %v1073
    %1117 = vmatprep.subr.bf16.mxu0 0
    %1118 = vmatpush2.bf16.msra.mxu0 %v1072
    %1119 = vmatprep.subr.bf16.mxu0 0
    %1120 = vmatpush2.bf16.msra.mxu0 %v1071
    %1121 = vmatprep.subr.bf16.mxu0 0
    %1122 = vmatpush2.bf16.msra.mxu0 %v1070
    %1123 = vmatprep.subr.bf16.mxu0 0
    %1124 = vmatpush2.bf16.msra.mxu0 %v1069
    %1125 = vmatprep.mubr.bf16.mxu0 %v446
    %1126 = vmatmul.mubr.bf16.gmra.mxu0 %v445
    %v1127 = vpop.f32.mrf.mxu0
    %v1128 = vadd.f32 %v992, %v1127
    %v1129 = vpop.f32.mrf.mxu0
    %v1130 = vpop.f32.mrf.mxu0
    %v1131 = vpop.f32.mrf.mxu0
    %1132 = vdwg.mxu0
    %v1133 = vld [vmem:[%s9] sm:$0x1]
    %v1135 = vlaneseq
    %v1136 = vshrl.u32 %v1135, 7
    %v1137 = vsub.s32 0, %v1136
    %v1138 = vrot.slane %v1133, %v1137
    %v1140 = vadd.f32 %v1128, %v1138
    %1141 = vst [vmem:[%s10] sm:$0xff] %v1140
    // Predicated region
    $region58: #{critic_forward.1} parent=1 // pred_check
      _
    $region59: #{critic_forward.1} parent=1 // pred_check_branch
      %1143 = sbr.rel (0) target = $region61
    $region60: #{critic_forward.1} parent=1 // pred_region
      _
    $region61: #{critic_forward.1} parent=1 // pred_fallthru
      _
    // Predicated region
    $region62: #{critic_forward.1} parent=1 // pred_check
      _
    $region63: #{critic_forward.1} parent=1 // pred_check_branch
      %1145 = sbr.rel (0) target = $region65
    $region64: #{critic_forward.1} parent=1 // pred_region
      _
    $region65: #{critic_forward.1} parent=1 // pred_fallthru
      _
    %1146 = vsyncpa [#allocation3], 1
    %1147 = vsyncpa [#allocation5], 1
    %1148 = vsyncpa [#allocation8], 1

</llo_original>
